<compile_context>
chip_gen: v7x
topology: tpu7x:2x2x1
jax: 0.10.0
libtpu: 0.0.40
codegen_flags: <defaults>
</compile_context>

<pallas_src>
import jax
import jax.numpy as jnp
import numpy as np
from jax.experimental import pallas as pl
from jax.experimental.pallas import tpu as pltpu


def _rbf_kernel(coef_ref, dist_ref, centers_ref, out_ref):
    coef = coef_ref[0]                                 # scalar from SMEM
    d = dist_ref[...]                                  # [tile_e, 1]
    c = centers_ref[...]                               # [1, C] (VMEM-resident)
    radial = d - c                                     # [tile_e, C] (VPU broadcast)
    out_ref[...] = jnp.exp(coef * radial * radial)     # exp -> EUP, single fused store


def _round_up(x, m):
    return (x + m - 1) // m * m


def _choose_tile_e(E, max_tile=2048, min_grid_steps=4):
    """Pick an edge-tile size: as large as possible (better HBM roofline, fewer
    per-step overheads) while keeping >= ~min_grid_steps grid steps so the
    pipeline and both v7x TensorCores stay busy. Multiple of 8 (sublane rule)."""
    tile = _round_up(max(pl.cdiv(E, min_grid_steps), 8), 8)
    return min(tile, max_tile)


@jax.jit
def rbf_layer(dist, centers, coef):
    """dist: [E] float32 distances; centers: [C] float32; coef: scalar (-1/gap).

    Returns rbf: [E, C] float32, rbf[e, k] = exp(coef * (dist[e] - centers[k])**2).
    """
    E = dist.shape[0]
    C = centers.shape[0]
    tile_e = _choose_tile_e(E)
    grid_e = pl.cdiv(E, tile_e)

    dist2 = dist.astype(jnp.float32).reshape(E, 1)
    centers2 = centers.astype(jnp.float32).reshape(1, C)
    coef_arr = jnp.asarray(coef, jnp.float32).reshape(1)

    out = pl.pallas_call(
        _rbf_kernel,
        out_shape=jax.ShapeDtypeStruct((E, C), jnp.float32),
        grid_spec=pltpu.PrefetchScalarGridSpec(
            num_scalar_prefetch=0,
            grid=(grid_e,),
            in_specs=[
                # coef scalar lives in SMEM; avoids recompiles when gap varies.
                pl.BlockSpec(memory_space=pltpu.MemorySpace.SMEM),
                # per-tile distances; ragged last block is padded/masked by Pallas.
                pl.BlockSpec((tile_e, 1), lambda i: (i, 0)),
                # centers row: constant index_map -> stays VMEM-resident.
                pl.BlockSpec((1, C), lambda i: (0, 0)),
            ],
            out_specs=pl.BlockSpec((tile_e, C), lambda i: (i, 0)),
        ),
        compiler_params=pltpu.CompilerParams(
            dimension_semantics=("parallel",),
        ),
    )(coef_arr, dist2, centers2)

    return out


def make_rbf_params(low=0.0, high=30.0, gap=0.1):
    """Mirror RBFLayer.__init__: centers array and the (recomputed) gap."""
    n_centers = int(np.ceil((high - low) / gap))
    centers = np.linspace(low, high, n_centers).astype(np.float32)
    real_gap = float(centers[1] - centers[0])
    return centers, real_gap


def _reference(dist, centers, coef):
    radial = dist[:, None] - centers[None, :]
    return jnp.exp(coef * radial * radial)


if __name__ == "__main__":
    # Deterministic small example: 1000 edges, default RBF settings (300 centers).
    # TODO(synk): DGL graph bookkeeping (g.apply_edges / g.edata) has no Pallas
    # equivalent; the kernel implements the per-edge dis2rbf math on the edge
    # distance vector, which is the entire forward computation.
    E = 1000
    centers_np, gap = make_rbf_params(low=0.0, high=30.0, gap=0.1)
    coef = -1.0 / gap

    key = jax.random.PRNGKey(0)
    dist = jax.random.uniform(key, (E,), jnp.float32, 0.0, 30.0)
    centers = jnp.asarray(centers_np)

    rbf = rbf_layer(dist, centers, jnp.float32(coef))
    jax.block_until_ready(rbf)

    ref = _reference(dist, centers, coef)
    np.testing.assert_allclose(np.asarray(rbf), np.asarray(ref),
                               rtol=1e-5, atol=1e-6)
    assert rbf.shape == (E, centers_np.shape[0])

    print("KERNEL_OK")
</pallas_src>

<mosaic_0001>
module attributes {stable_mosaic.version = 11 : i64} {
  func.func @_rbf_kernel(%arg0: i32, %arg1: memref<1xf32, #tpu.memory_space<smem>>, %arg2: memref<256x1xf32, #tpu.memory_space<vmem>>, %arg3: memref<1x300xf32, #tpu.memory_space<vmem>>, %arg4: memref<256x300xf32, #tpu.memory_space<vmem>>) attributes {dimension_semantics = [#tpu.dimension_semantics<parallel>], iteration_bounds = array<i64: 4>, scalar_prefetch = 0 : i64, scratch_operands = 0 : i64, tpu.core_type = #tpu.core_type<tc>, window_params = [{transform_indices = @transform_0, window_bounds = array<i64: 1>}, {transform_indices = @transform_1, window_bounds = array<i64: 256, 1>}, {pipeline_mode = #tpu.pipeline_mode<synchronous>, transform_indices = @transform_2, window_bounds = array<i64: 1, 300>}, {transform_indices = @transform_3, window_bounds = array<i64: 256, 300>}]} {
    %c0 = arith.constant 0 : index
    %0 = memref.load %arg1[%c0] : memref<1xf32, #tpu.memory_space<smem>>
    %c0_0 = arith.constant 0 : index
    %c0_1 = arith.constant 0 : index
    %1 = vector.load %arg2[%c0_0, %c0_1] : memref<256x1xf32, #tpu.memory_space<vmem>>, vector<256x1xf32>
    %c0_2 = arith.constant 0 : index
    %c0_3 = arith.constant 0 : index
    %2 = vector.load %arg3[%c0_2, %c0_3] : memref<1x300xf32, #tpu.memory_space<vmem>>, vector<1x300xf32>
    %3 = vector.broadcast %1 : vector<256x1xf32> to vector<256x300xf32>
    %4 = vector.broadcast %2 : vector<1x300xf32> to vector<256x300xf32>
    %5 = arith.subf %3, %4 : vector<256x300xf32>
    %6 = vector.broadcast %0 : f32 to vector<256x300xf32>
    %7 = arith.mulf %6, %5 : vector<256x300xf32>
    %8 = arith.mulf %7, %5 : vector<256x300xf32>
    %9 = math.exp %8 : vector<256x300xf32>
    %c0_4 = arith.constant 0 : index
    %c0_5 = arith.constant 0 : index
    %10 = vector.load %arg4[%c0_4, %c0_5] : memref<256x300xf32, #tpu.memory_space<vmem>>, vector<256x300xf32>
    tpu.vector_store %arg4[%c0_4, %c0_5], %9 {strides = array<i32>} : memref<256x300xf32, #tpu.memory_space<vmem>>, vector<256x300xf32>,
    return
  }
  func.func @transform_0(%arg0: i32) -> i32 {
    %c0_i32 = arith.constant 0 : i32
    %c0_i32_0 = arith.constant 0 : i32
    return %c0_i32 : i32
  }
  func.func @transform_1(%arg0: i32) -> (i32, i32) {
    %c0_i32 = arith.constant 0 : i32
    %c0_i32_0 = arith.constant 0 : i32
    return %arg0, %c0_i32 : i32, i32
  }
  func.func @transform_2(%arg0: i32) -> (i32, i32) {
    %c0_i32 = arith.constant 0 : i32
    %c0_i32_0 = arith.constant 0 : i32
    %c0_i32_1 = arith.constant 0 : i32
    return %c0_i32, %c0_i32_0 : i32, i32
  }
  func.func @transform_3(%arg0: i32) -> (i32, i32) {
    %c0_i32 = arith.constant 0 : i32
    %c0_i32_0 = arith.constant 0 : i32
    return %arg0, %c0_i32 : i32, i32
  }
}

</mosaic_0001>

<llo_original>
// kernel: rbf_layer.1
$region0: #{rbf_layer.1}
  #allocation0 [shape = 'u32[]', space=smem, size = 0x4, offset = 0x4, fixed_abs, tag = 'smem constant byte address 0x4 - core index']
  #allocation1 [shape = 'u32[144,128]{1,0:T(1,128)}', space=vmem, size = 0x12000, scoped, tag = 'internal scratch']
  #allocation2 [shape = 'f32[1]{0:T(128)S(6)}', space=smem, size = 0x200, scoped, tag = 'scoped memory for rbf_layer.1']
  %s0 = inlined_call_operand.<no memory space> [shape: f32[1], index: 0, kind: input, shape index: {}]
  %s1 = inlined_call_operand.vmem [shape: f32[1000,1], index: 1, kind: input, shape index: {}]
  %s2 = inlined_call_operand.vmem [shape: f32[1,300], index: 2, kind: input, shape index: {}]
  %s3 = inlined_call_operand.vmem [shape: f32[1000,300], index: 3, kind: output, shape index: {}]
  %s4 = sld [smem:[#allocation0]]
  $region71: #{rbf_layer.1} parent=0
    _
  %s6 = ssub.s32 1, %s4
  %s7 = scalar_select 0, %s6, %s4
  %8 = sst [smem:[#allocation2]] %s0
  $region1: #{rbf_layer.1} parent=0
    #allocation3 [shape = 'u8[786432]{0}', space=vmem, size = 0xc0000, scoped, tag = 'output window, operand 0']
    loop: start=0, step=1, limit=6
    $region2: #{rbf_layer.1} parent=1 // loop_pre_header
      _
    $region3: #{rbf_layer.1} parent=1 // loop_header
      %s10 = sphi 0, %s14
      %p11 = scmp.ge.s32.totalorder %s10, 6
      %s18 = sphi 0, %s18
      %s20 = sphi 0, %s18
      %s21 = sphi 0, %s20
      %s35 = sphi 0, %s21
      %s41 = sphi 0, %s43
      %s44 = sphi 0, %s41
      %s45 = sphi 0, %s44
      %s61 = sphi 0, %s45
      %s65 = sphi 0, %s65
      %s67 = sphi 0, %s65
      %s68 = sphi 0, %s67
      %s82 = sphi 0, %s68
      %s88 = sphi 0, %s90
      %s91 = sphi 0, %s88
      %s92 = sphi 0, %s91
      %s108 = sphi 0, %s92
    $region4: #{rbf_layer.1} parent=1 // loop_header_branch
      %13 = sbr.rel (%p11) target = $region8
    $region5: #{rbf_layer.1} parent=1 // loop_body
      %s15 = ssub.s32 %s10, 1
      %s16 = ssub.s32 %s10, 2
      %s17 = sadd.s32 %s10, 1
      %s19 = sadd.s32 %s18, 1
      %p22 = scmp.eq.s32.totalorder %s10, 3
      %p23 = scmp.ne.s32.totalorder %s18, %s20
      %p24 = scmp.eq.s32.totalorder %s10, 0
      %p25 = por %p23, %p24
      %p26 = scmp.ne.s32.totalorder %s18, %s20
      %p27 = scmp.eq.s32.totalorder %s15, 3
      %p28 = por %p26, %p27
      %p29 = scmp.ne.s32.totalorder %s20, %s21
      %p30 = scmp.eq.s32.totalorder %s15, 0
      %p31 = por %p29, %p30
      %p32 = scmp.ne.s32.totalorder %s20, %s21
      %p33 = scmp.eq.s32.totalorder %s16, 3
      %p34 = por %p32, %p33
      %p36 = scmp.ne.s32.totalorder %s21, %s35
      %p37 = scmp.eq.s32.totalorder %s16, 0
      %p38 = por %p36, %p37
      %s39 = ssub.s32 %s10, %s17
      %p40 = scmp.eq.s32.totalorder %s39, 0
      %s42 = sadd.s32 %s41, 1
      %s43 = scalar_select %p40, %s41, %s42
      %p46 = pneg %p40
      %p47 = scmp.eq.s32.totalorder %s10, 3
      %p48 = por %p46, %p47
      %p49 = scmp.ne.s32.totalorder %s41, %s44
      %p50 = scmp.eq.s32.totalorder %s10, 0
      %p51 = por %p49, %p50
      %p52 = scmp.ne.s32.totalorder %s41, %s44
      %p53 = scmp.eq.s32.totalorder %s15, 3
      %p54 = por %p52, %p53
      %p55 = scmp.ne.s32.totalorder %s44, %s45
      %p56 = scmp.eq.s32.totalorder %s15, 0
      %p57 = por %p55, %p56
      %p58 = scmp.ne.s32.totalorder %s44, %s45
      %p59 = scmp.eq.s32.totalorder %s16, 3
      %p60 = por %p58, %p59
      %p62 = scmp.ne.s32.totalorder %s45, %s61
      %p63 = scmp.eq.s32.totalorder %s16, 0
      %p64 = por %p62, %p63
      %s66 = sadd.s32 %s65, 1
      %p69 = scmp.eq.s32.totalorder %s10, 3
      %p70 = scmp.ne.s32.totalorder %s65, %s67
      %p71 = scmp.eq.s32.totalorder %s10, 0
      %p72 = por %p70, %p71
      %p73 = scmp.ne.s32.totalorder %s65, %s67
      %p74 = scmp.eq.s32.totalorder %s15, 3
      %p75 = por %p73, %p74
      %p76 = scmp.ne.s32.totalorder %s67, %s68
      %p77 = scmp.eq.s32.totalorder %s15, 0
      %p78 = por %p76, %p77
      %p79 = scmp.ne.s32.totalorder %s67, %s68
      %p80 = scmp.eq.s32.totalorder %s16, 3
      %p81 = por %p79, %p80
      %p83 = scmp.ne.s32.totalorder %s68, %s82
      %p84 = scmp.eq.s32.totalorder %s16, 0
      %p85 = por %p83, %p84
      %s86 = ssub.s32 %s10, %s17
      %p87 = scmp.eq.s32.totalorder %s86, 0
      %s89 = sadd.s32 %s88, 1
      %s90 = scalar_select %p87, %s88, %s89
      %p93 = pneg %p87
      %p94 = scmp.eq.s32.totalorder %s10, 3
      %p95 = por %p93, %p94
      %p96 = scmp.ne.s32.totalorder %s88, %s91
      %p97 = scmp.eq.s32.totalorder %s10, 0
      %p98 = por %p96, %p97
      %p99 = scmp.ne.s32.totalorder %s88, %s91
      %p100 = scmp.eq.s32.totalorder %s15, 3
      %p101 = por %p99, %p100
      %p102 = scmp.ne.s32.totalorder %s91, %s92
      %p103 = scmp.eq.s32.totalorder %s15, 0
      %p104 = por %p102, %p103
      %p105 = scmp.ne.s32.totalorder %s91, %s92
      %p106 = scmp.eq.s32.totalorder %s16, 3
      %p107 = por %p105, %p106
      %p109 = scmp.ne.s32.totalorder %s92, %s108
      %p110 = scmp.eq.s32.totalorder %s16, 0
      %p111 = por %p109, %p110
      %p112 = scmp.le.s32.totalorder 1, %s10
      %p113 = scmp.lt.s32.totalorder %s10, 5
      %p114 = pnand %p112, %p113
      %p115 = pneg %p114
      // Predicated region
      $region9: #{rbf_layer.1} parent=5 // pred_check
        _
      $region10: #{rbf_layer.1} parent=5 // pred_check_branch
        %117 = sbr.rel (%p114) target = $region12
      $region11: #{rbf_layer.1} parent=5 // pred_region
        %s118 = ssub.s32 %s10, 1
        // Predicated region
        $region13: #{rbf_layer.1} parent=11 // pred_check
          %p119 = pneg %p31
        $region14: #{rbf_layer.1} parent=11 // pred_check_branch
          %121 = sbr.rel (%p119) target = $region16
        $region15: #{rbf_layer.1} parent=11 // pred_region
          _
        $region16: #{rbf_layer.1} parent=11 // pred_fallthru
          _
        // Predicated region
        $region17: #{rbf_layer.1} parent=11 // pred_check
          %p122 = pneg %p78
        $region18: #{rbf_layer.1} parent=11 // pred_check_branch
          %124 = sbr.rel (%p122) target = $region20
        $region19: #{rbf_layer.1} parent=11 // pred_region
          _
        $region20: #{rbf_layer.1} parent=11 // pred_fallthru
          _
      $region12: #{rbf_layer.1} parent=5 // pred_fallthru
        _
      %p125 = scmp.lt.s32.totalorder %s10, 4
      // Predicated region
      $region21: #{rbf_layer.1} parent=5 // pred_check
        %p126 = pneg %p125
      $region22: #{rbf_layer.1} parent=5 // pred_check_branch
        %128 = sbr.rel (%p126) target = $region24
      $region23: #{rbf_layer.1} parent=5 // pred_region
        // Predicated region
        $region25: #{rbf_layer.1} parent=23 // pred_check
          %p129 = pneg %p51
        $region26: #{rbf_layer.1} parent=23 // pred_check_branch
          %131 = sbr.rel (%p129) target = $region28
        $region27: #{rbf_layer.1} parent=23 // pred_region
          %s132 = smul.u32 32, %s10
          %s133 = ssub.s32 125, %s132
          %p134 = scmp.lt.s32.totalorder %s133, 32
          %s135 = scalar_select %p134, %s133, 32
          %s136 = smul.u32 128, %s135
          %p137 = scmp.lt.s32.totalorder %s132, 124
          %s138 = scalar_select %p137, %s132, 124
          %s139 = smul.addr %s138, 8
          %s140 = scalar_lea.vmem %s1, %s139
          %s141 = smul.u32 32, %s10
          %s142 = ssub.s32 125, %s141
          %p143 = scmp.lt.s32.totalorder %s142, 32
          %s144 = scalar_select %p143, %s142, 32
          %s145 = smul.u32 128, %s144
        $region28: #{rbf_layer.1} parent=23 // pred_fallthru
          _
      $region24: #{rbf_layer.1} parent=5 // pred_fallthru
        _
      %p146 = scmp.le.s32.totalorder 1, %s10
      %p147 = scmp.lt.s32.totalorder %s10, 5
      %p148 = pnand %p146, %p147
      %p149 = pneg %p148
      // Predicated region
      $region29: #{rbf_layer.1} parent=5 // pred_check
        _
      $region30: #{rbf_layer.1} parent=5 // pred_check_branch
        %151 = sbr.rel (%p148) target = $region32
      $region31: #{rbf_layer.1} parent=5 // pred_region
        %s152 = ssub.s32 %s10, 1
        %p153 = pneg %p31
        %p154 = pneg %p28
        %s155 = smul.u32 32, %s15
        %s156 = ssub.s32 125, %s155
        %p157 = scmp.lt.s32.totalorder %s156, 32
        %s158 = scalar_select %p157, %s156, 32
        %s159 = smul.u32 128, %s158
        %p160 = scmp.lt.s32.totalorder %s155, 124
        %s161 = scalar_select %p160, %s155, 124
        %s162 = smul.addr %s161, 8
        %s163 = scalar_lea.vmem %s1, %s162
        %p164 = pneg %p57
        %p165 = pneg %p54
        %p166 = pneg %p78
        %p167 = pneg %p75
        %p168 = pneg %p104
        %p169 = pneg %p101
        %s170 = sand.u32 %s91, 1
        %s171 = sand.u32 %s91, 1
        %s172 = smul.addr %s171, 768
        %s173 = scalar_lea.vmem [#allocation3], %s172
        %s174 = smul.u32 32, %s15
        %s175 = ssub.s32 125, %s174
        %p176 = scmp.lt.s32.totalorder %s175, 32
        %s177 = scalar_select %p176, %s175, 32
        %s178 = smul.u32 128, %s177
        %p179 = scmp.lt.s32.totalorder %s174, 124
        %s180 = scalar_select %p179, %s174, 124
        %s181 = smul.addr %s180, 8
        %s182 = scalar_lea.vmem %s1, %s181
        %s183 = smul.u32 32, %s15
        %s184 = ssub.s32 125, %s183
        %p185 = scmp.lt.s32.totalorder %s184, 32
        %s186 = scalar_select %p185, %s184, 32
        %s187 = smul.u32 128, %s186
        %s188 = smul.u32 32, %s15
        %s189 = ssub.s32 125, %s188
        %p190 = scmp.lt.s32.totalorder %s189, 32
        %s191 = scalar_select %p190, %s189, 32
        %s192 = smul.u32 128, %s191
        %s193 = smul.u32 %s192, 3
        %s194 = sld [smem:[#allocation2]]
        %v195 = vld [vmem:[%s182] sm:$0xff]
        %v196 = vld [vmem:[%s182 + $0x8] sm:$0xff]
        %v197 = vld [vmem:[%s182 + $0x10] sm:$0xff]
        %v198 = vld [vmem:[%s182 + $0x18] sm:$0xff]
        %v199 = vld [vmem:[%s182 + $0x20] sm:$0xff]
        %v200 = vld [vmem:[%s182 + $0x28] sm:$0xff]
        %v201 = vld [vmem:[%s182 + $0x30] sm:$0xff]
        %v202 = vld [vmem:[%s182 + $0x38] sm:$0xff]
        %v203 = vld [vmem:[%s182 + $0x40] sm:$0xff]
        %v204 = vld [vmem:[%s182 + $0x48] sm:$0xff]
        %v205 = vld [vmem:[%s182 + $0x50] sm:$0xff]
        %v206 = vld [vmem:[%s182 + $0x58] sm:$0xff]
        %v207 = vld [vmem:[%s182 + $0x60] sm:$0xff]
        %v208 = vld [vmem:[%s182 + $0x68] sm:$0xff]
        %v209 = vld [vmem:[%s182 + $0x70] sm:$0xff]
        %v210 = vld [vmem:[%s182 + $0x78] sm:$0xff]
        %v211 = vld [vmem:[%s182 + $0x80] sm:$0xff]
        %v212 = vld [vmem:[%s182 + $0x88] sm:$0xff]
        %v213 = vld [vmem:[%s182 + $0x90] sm:$0xff]
        %v214 = vld [vmem:[%s182 + $0x98] sm:$0xff]
        %v215 = vld [vmem:[%s182 + $0xa0] sm:$0xff]
        %v216 = vld [vmem:[%s182 + $0xa8] sm:$0xff]
        %v217 = vld [vmem:[%s182 + $0xb0] sm:$0xff]
        %v218 = vld [vmem:[%s182 + $0xb8] sm:$0xff]
        %v219 = vld [vmem:[%s182 + $0xc0] sm:$0xff]
        %v220 = vld [vmem:[%s182 + $0xc8] sm:$0xff]
        %v221 = vld [vmem:[%s182 + $0xd0] sm:$0xff]
        %v222 = vld [vmem:[%s182 + $0xd8] sm:$0xff]
        %v223 = vld [vmem:[%s182 + $0xe0] sm:$0xff]
        %v224 = vld [vmem:[%s182 + $0xe8] sm:$0xff]
        %v225 = vld [vmem:[%s182 + $0xf0] sm:$0xff]
        %v226 = vld [vmem:[%s182 + $0xf8] sm:$0xff]
        %v227 = vld [vmem:[%s2] sm:$0x7]
        %229 = vset.pattern.permute.xlu0 0
        %230 = vperm.xlu0 %229, %v195
        %v231 = vpop.permute.xlu0 %230
        %234 = vset.pattern.permute.xlu0 0
        %235 = vperm.xlu0 %234, %v196
        %v236 = vpop.permute.xlu0 %235
        %239 = vset.pattern.permute.xlu0 0
        %240 = vperm.xlu0 %239, %v197
        %v241 = vpop.permute.xlu0 %240
        %244 = vset.pattern.permute.xlu0 0
        %245 = vperm.xlu0 %244, %v198
        %v246 = vpop.permute.xlu0 %245
        %249 = vset.pattern.permute.xlu0 0
        %250 = vperm.xlu0 %249, %v199
        %v251 = vpop.permute.xlu0 %250
        %254 = vset.pattern.permute.xlu0 0
        %255 = vperm.xlu0 %254, %v200
        %v256 = vpop.permute.xlu0 %255
        %259 = vset.pattern.permute.xlu0 0
        %260 = vperm.xlu0 %259, %v201
        %v261 = vpop.permute.xlu0 %260
        %264 = vset.pattern.permute.xlu0 0
        %265 = vperm.xlu0 %264, %v202
        %v266 = vpop.permute.xlu0 %265
        %269 = vset.pattern.permute.xlu0 0
        %270 = vperm.xlu0 %269, %v203
        %v271 = vpop.permute.xlu0 %270
        %274 = vset.pattern.permute.xlu0 0
        %275 = vperm.xlu0 %274, %v204
        %v276 = vpop.permute.xlu0 %275
        %279 = vset.pattern.permute.xlu0 0
        %280 = vperm.xlu0 %279, %v205
        %v281 = vpop.permute.xlu0 %280
        %284 = vset.pattern.permute.xlu0 0
        %285 = vperm.xlu0 %284, %v206
        %v286 = vpop.permute.xlu0 %285
        %289 = vset.pattern.permute.xlu0 0
        %290 = vperm.xlu0 %289, %v207
        %v291 = vpop.permute.xlu0 %290
        %294 = vset.pattern.permute.xlu0 0
        %295 = vperm.xlu0 %294, %v208
        %v296 = vpop.permute.xlu0 %295
        %299 = vset.pattern.permute.xlu0 0
        %300 = vperm.xlu0 %299, %v209
        %v301 = vpop.permute.xlu0 %300
        %304 = vset.pattern.permute.xlu0 0
        %305 = vperm.xlu0 %304, %v210
        %v306 = vpop.permute.xlu0 %305
        %309 = vset.pattern.permute.xlu0 0
        %310 = vperm.xlu0 %309, %v211
        %v311 = vpop.permute.xlu0 %310
        %314 = vset.pattern.permute.xlu0 0
        %315 = vperm.xlu0 %314, %v212
        %v316 = vpop.permute.xlu0 %315
        %319 = vset.pattern.permute.xlu0 0
        %320 = vperm.xlu0 %319, %v213
        %v321 = vpop.permute.xlu0 %320
        %324 = vset.pattern.permute.xlu0 0
        %325 = vperm.xlu0 %324, %v214
        %v326 = vpop.permute.xlu0 %325
        %329 = vset.pattern.permute.xlu0 0
        %330 = vperm.xlu0 %329, %v215
        %v331 = vpop.permute.xlu0 %330
        %334 = vset.pattern.permute.xlu0 0
        %335 = vperm.xlu0 %334, %v216
        %v336 = vpop.permute.xlu0 %335
        %339 = vset.pattern.permute.xlu0 0
        %340 = vperm.xlu0 %339, %v217
        %v341 = vpop.permute.xlu0 %340
        %344 = vset.pattern.permute.xlu0 0
        %345 = vperm.xlu0 %344, %v218
        %v346 = vpop.permute.xlu0 %345
        %349 = vset.pattern.permute.xlu0 0
        %350 = vperm.xlu0 %349, %v219
        %v351 = vpop.permute.xlu0 %350
        %354 = vset.pattern.permute.xlu0 0
        %355 = vperm.xlu0 %354, %v220
        %v356 = vpop.permute.xlu0 %355
        %359 = vset.pattern.permute.xlu0 0
        %360 = vperm.xlu0 %359, %v221
        %v361 = vpop.permute.xlu0 %360
        %364 = vset.pattern.permute.xlu0 0
        %365 = vperm.xlu0 %364, %v222
        %v366 = vpop.permute.xlu0 %365
        %369 = vset.pattern.permute.xlu0 0
        %370 = vperm.xlu0 %369, %v223
        %v371 = vpop.permute.xlu0 %370
        %374 = vset.pattern.permute.xlu0 0
        %375 = vperm.xlu0 %374, %v224
        %v376 = vpop.permute.xlu0 %375
        %379 = vset.pattern.permute.xlu0 0
        %380 = vperm.xlu0 %379, %v225
        %v381 = vpop.permute.xlu0 %380
        %384 = vset.pattern.permute.xlu0 0
        %385 = vperm.xlu0 %384, %v226
        %v386 = vpop.permute.xlu0 %385
        %v389 = vlaneseq
        %v390 = vshrl.u32 %v389, 7
        %v391 = vsub.s32 0, %v390
        %v392 = vrot.slane %v227, %v391
        %v393 = vlaneseq
        %v394 = vshrl.u32 %v393, 7
        %v395 = vsub.s32 1, %v394
        %v396 = vrot.slane %v227, %v395
        %v397 = vlaneseq
        %v398 = vshrl.u32 %v397, 7
        %v399 = vsub.s32 2, %v398
        %v400 = vrot.slane %v227, %v399
        %v404 = vsub.f32 %v231, %v392
        %v405 = vsub.f32 %v231, %v396
        %v406 = vsub.f32 %v231, %v400
        %v407 = vsub.f32 %v236, %v392
        %v408 = vsub.f32 %v236, %v396
        %v409 = vsub.f32 %v236, %v400
        %v410 = vsub.f32 %v241, %v392
        %v411 = vsub.f32 %v241, %v396
        %v412 = vsub.f32 %v241, %v400
        %v413 = vsub.f32 %v246, %v392
        %v414 = vsub.f32 %v246, %v396
        %v415 = vsub.f32 %v246, %v400
        %v416 = vsub.f32 %v251, %v392
        %v417 = vsub.f32 %v251, %v396
        %v418 = vsub.f32 %v251, %v400
        %v419 = vsub.f32 %v256, %v392
        %v420 = vsub.f32 %v256, %v396
        %v421 = vsub.f32 %v256, %v400
        %v422 = vsub.f32 %v261, %v392
        %v423 = vsub.f32 %v261, %v396
        %v424 = vsub.f32 %v261, %v400
        %v425 = vsub.f32 %v266, %v392
        %v426 = vsub.f32 %v266, %v396
        %v427 = vsub.f32 %v266, %v400
        %v428 = vsub.f32 %v271, %v392
        %v429 = vsub.f32 %v271, %v396
        %v430 = vsub.f32 %v271, %v400
        %v431 = vsub.f32 %v276, %v392
        %v432 = vsub.f32 %v276, %v396
        %v433 = vsub.f32 %v276, %v400
        %v434 = vsub.f32 %v281, %v392
        %v435 = vsub.f32 %v281, %v396
        %v436 = vsub.f32 %v281, %v400
        %v437 = vsub.f32 %v286, %v392
        %v438 = vsub.f32 %v286, %v396
        %v439 = vsub.f32 %v286, %v400
        %v440 = vsub.f32 %v291, %v392
        %v441 = vsub.f32 %v291, %v396
        %v442 = vsub.f32 %v291, %v400
        %v443 = vsub.f32 %v296, %v392
        %v444 = vsub.f32 %v296, %v396
        %v445 = vsub.f32 %v296, %v400
        %v446 = vsub.f32 %v301, %v392
        %v447 = vsub.f32 %v301, %v396
        %v448 = vsub.f32 %v301, %v400
        %v449 = vsub.f32 %v306, %v392
        %v450 = vsub.f32 %v306, %v396
        %v451 = vsub.f32 %v306, %v400
        %v452 = vsub.f32 %v311, %v392
        %v453 = vsub.f32 %v311, %v396
        %v454 = vsub.f32 %v311, %v400
        %v455 = vsub.f32 %v316, %v392
        %v456 = vsub.f32 %v316, %v396
        %v457 = vsub.f32 %v316, %v400
        %v458 = vsub.f32 %v321, %v392
        %v459 = vsub.f32 %v321, %v396
        %v460 = vsub.f32 %v321, %v400
        %v461 = vsub.f32 %v326, %v392
        %v462 = vsub.f32 %v326, %v396
        %v463 = vsub.f32 %v326, %v400
        %v464 = vsub.f32 %v331, %v392
        %v465 = vsub.f32 %v331, %v396
        %v466 = vsub.f32 %v331, %v400
        %v467 = vsub.f32 %v336, %v392
        %v468 = vsub.f32 %v336, %v396
        %v469 = vsub.f32 %v336, %v400
        %v470 = vsub.f32 %v341, %v392
        %v471 = vsub.f32 %v341, %v396
        %v472 = vsub.f32 %v341, %v400
        %v473 = vsub.f32 %v346, %v392
        %v474 = vsub.f32 %v346, %v396
        %v475 = vsub.f32 %v346, %v400
        %v476 = vsub.f32 %v351, %v392
        %v477 = vsub.f32 %v351, %v396
        %v478 = vsub.f32 %v351, %v400
        %v479 = vsub.f32 %v356, %v392
        %v480 = vsub.f32 %v356, %v396
        %v481 = vsub.f32 %v356, %v400
        %v482 = vsub.f32 %v361, %v392
        %v483 = vsub.f32 %v361, %v396
        %v484 = vsub.f32 %v361, %v400
        %v485 = vsub.f32 %v366, %v392
        %v486 = vsub.f32 %v366, %v396
        %v487 = vsub.f32 %v366, %v400
        %v488 = vsub.f32 %v371, %v392
        %v489 = vsub.f32 %v371, %v396
        %v490 = vsub.f32 %v371, %v400
        %v491 = vsub.f32 %v376, %v392
        %v492 = vsub.f32 %v376, %v396
        %v493 = vsub.f32 %v376, %v400
        %v494 = vsub.f32 %v381, %v392
        %v495 = vsub.f32 %v381, %v396
        %v496 = vsub.f32 %v381, %v400
        %v497 = vsub.f32 %v386, %v392
        %v498 = vsub.f32 %v386, %v396
        %v499 = vsub.f32 %v386, %v400
        %v500 = vstv %s194
        %v501 = vmul.f32 %v500, %v404
        %v502 = vmul.f32 %v500, %v405
        %v503 = vmul.f32 %v500, %v406
        %v504 = vmul.f32 %v500, %v407
        %v505 = vmul.f32 %v500, %v408
        %v506 = vmul.f32 %v500, %v409
        %v507 = vmul.f32 %v500, %v410
        %v508 = vmul.f32 %v500, %v411
        %v509 = vmul.f32 %v500, %v412
        %v510 = vmul.f32 %v500, %v413
        %v511 = vmul.f32 %v500, %v414
        %v512 = vmul.f32 %v500, %v415
        %v513 = vmul.f32 %v500, %v416
        %v514 = vmul.f32 %v500, %v417
        %v515 = vmul.f32 %v500, %v418
        %v516 = vmul.f32 %v500, %v419
        %v517 = vmul.f32 %v500, %v420
        %v518 = vmul.f32 %v500, %v421
        %v519 = vmul.f32 %v500, %v422
        %v520 = vmul.f32 %v500, %v423
        %v521 = vmul.f32 %v500, %v424
        %v522 = vmul.f32 %v500, %v425
        %v523 = vmul.f32 %v500, %v426
        %v524 = vmul.f32 %v500, %v427
        %v525 = vmul.f32 %v500, %v428
        %v526 = vmul.f32 %v500, %v429
        %v527 = vmul.f32 %v500, %v430
        %v528 = vmul.f32 %v500, %v431
        %v529 = vmul.f32 %v500, %v432
        %v530 = vmul.f32 %v500, %v433
        %v531 = vmul.f32 %v500, %v434
        %v532 = vmul.f32 %v500, %v435
        %v533 = vmul.f32 %v500, %v436
        %v534 = vmul.f32 %v500, %v437
        %v535 = vmul.f32 %v500, %v438
        %v536 = vmul.f32 %v500, %v439
        %v537 = vmul.f32 %v500, %v440
        %v538 = vmul.f32 %v500, %v441
        %v539 = vmul.f32 %v500, %v442
        %v540 = vmul.f32 %v500, %v443
        %v541 = vmul.f32 %v500, %v444
        %v542 = vmul.f32 %v500, %v445
        %v543 = vmul.f32 %v500, %v446
        %v544 = vmul.f32 %v500, %v447
        %v545 = vmul.f32 %v500, %v448
        %v546 = vmul.f32 %v500, %v449
        %v547 = vmul.f32 %v500, %v450
        %v548 = vmul.f32 %v500, %v451
        %v549 = vmul.f32 %v500, %v452
        %v550 = vmul.f32 %v500, %v453
        %v551 = vmul.f32 %v500, %v454
        %v552 = vmul.f32 %v500, %v455
        %v553 = vmul.f32 %v500, %v456
        %v554 = vmul.f32 %v500, %v457
        %v555 = vmul.f32 %v500, %v458
        %v556 = vmul.f32 %v500, %v459
        %v557 = vmul.f32 %v500, %v460
        %v558 = vmul.f32 %v500, %v461
        %v559 = vmul.f32 %v500, %v462
        %v560 = vmul.f32 %v500, %v463
        %v561 = vmul.f32 %v500, %v464
        %v562 = vmul.f32 %v500, %v465
        %v563 = vmul.f32 %v500, %v466
        %v564 = vmul.f32 %v500, %v467
        %v565 = vmul.f32 %v500, %v468
        %v566 = vmul.f32 %v500, %v469
        %v567 = vmul.f32 %v500, %v470
        %v568 = vmul.f32 %v500, %v471
        %v569 = vmul.f32 %v500, %v472
        %v570 = vmul.f32 %v500, %v473
        %v571 = vmul.f32 %v500, %v474
        %v572 = vmul.f32 %v500, %v475
        %v573 = vmul.f32 %v500, %v476
        %v574 = vmul.f32 %v500, %v477
        %v575 = vmul.f32 %v500, %v478
        %v576 = vmul.f32 %v500, %v479
        %v577 = vmul.f32 %v500, %v480
        %v578 = vmul.f32 %v500, %v481
        %v579 = vmul.f32 %v500, %v482
        %v580 = vmul.f32 %v500, %v483
        %v581 = vmul.f32 %v500, %v484
        %v582 = vmul.f32 %v500, %v485
        %v583 = vmul.f32 %v500, %v486
        %v584 = vmul.f32 %v500, %v487
        %v585 = vmul.f32 %v500, %v488
        %v586 = vmul.f32 %v500, %v489
        %v587 = vmul.f32 %v500, %v490
        %v588 = vmul.f32 %v500, %v491
        %v589 = vmul.f32 %v500, %v492
        %v590 = vmul.f32 %v500, %v493
        %v591 = vmul.f32 %v500, %v494
        %v592 = vmul.f32 %v500, %v495
        %v593 = vmul.f32 %v500, %v496
        %v594 = vmul.f32 %v500, %v497
        %v595 = vmul.f32 %v500, %v498
        %v596 = vmul.f32 %v500, %v499
        %v597 = vmul.f32 %v501, %v404
        %v598 = vmul.f32 %v502, %v405
        %v599 = vmul.f32 %v503, %v406
        %v600 = vmul.f32 %v504, %v407
        %v601 = vmul.f32 %v505, %v408
        %v602 = vmul.f32 %v506, %v409
        %v603 = vmul.f32 %v507, %v410
        %v604 = vmul.f32 %v508, %v411
        %v605 = vmul.f32 %v509, %v412
        %v606 = vmul.f32 %v510, %v413
        %v607 = vmul.f32 %v511, %v414
        %v608 = vmul.f32 %v512, %v415
        %v609 = vmul.f32 %v513, %v416
        %v610 = vmul.f32 %v514, %v417
        %v611 = vmul.f32 %v515, %v418
        %v612 = vmul.f32 %v516, %v419
        %v613 = vmul.f32 %v517, %v420
        %v614 = vmul.f32 %v518, %v421
        %v615 = vmul.f32 %v519, %v422
        %v616 = vmul.f32 %v520, %v423
        %v617 = vmul.f32 %v521, %v424
        %v618 = vmul.f32 %v522, %v425
        %v619 = vmul.f32 %v523, %v426
        %v620 = vmul.f32 %v524, %v427
        %v621 = vmul.f32 %v525, %v428
        %v622 = vmul.f32 %v526, %v429
        %v623 = vmul.f32 %v527, %v430
        %v624 = vmul.f32 %v528, %v431
        %v625 = vmul.f32 %v529, %v432
        %v626 = vmul.f32 %v530, %v433
        %v627 = vmul.f32 %v531, %v434
        %v628 = vmul.f32 %v532, %v435
        %v629 = vmul.f32 %v533, %v436
        %v630 = vmul.f32 %v534, %v437
        %v631 = vmul.f32 %v535, %v438
        %v632 = vmul.f32 %v536, %v439
        %v633 = vmul.f32 %v537, %v440
        %v634 = vmul.f32 %v538, %v441
        %v635 = vmul.f32 %v539, %v442
        %v636 = vmul.f32 %v540, %v443
        %v637 = vmul.f32 %v541, %v444
        %v638 = vmul.f32 %v542, %v445
        %v639 = vmul.f32 %v543, %v446
        %v640 = vmul.f32 %v544, %v447
        %v641 = vmul.f32 %v545, %v448
        %v642 = vmul.f32 %v546, %v449
        %v643 = vmul.f32 %v547, %v450
        %v644 = vmul.f32 %v548, %v451
        %v645 = vmul.f32 %v549, %v452
        %v646 = vmul.f32 %v550, %v453
        %v647 = vmul.f32 %v551, %v454
        %v648 = vmul.f32 %v552, %v455
        %v649 = vmul.f32 %v553, %v456
        %v650 = vmul.f32 %v554, %v457
        %v651 = vmul.f32 %v555, %v458
        %v652 = vmul.f32 %v556, %v459
        %v653 = vmul.f32 %v557, %v460
        %v654 = vmul.f32 %v558, %v461
        %v655 = vmul.f32 %v559, %v462
        %v656 = vmul.f32 %v560, %v463
        %v657 = vmul.f32 %v561, %v464
        %v658 = vmul.f32 %v562, %v465
        %v659 = vmul.f32 %v563, %v466
        %v660 = vmul.f32 %v564, %v467
        %v661 = vmul.f32 %v565, %v468
        %v662 = vmul.f32 %v566, %v469
        %v663 = vmul.f32 %v567, %v470
        %v664 = vmul.f32 %v568, %v471
        %v665 = vmul.f32 %v569, %v472
        %v666 = vmul.f32 %v570, %v473
        %v667 = vmul.f32 %v571, %v474
        %v668 = vmul.f32 %v572, %v475
        %v669 = vmul.f32 %v573, %v476
        %v670 = vmul.f32 %v574, %v477
        %v671 = vmul.f32 %v575, %v478
        %v672 = vmul.f32 %v576, %v479
        %v673 = vmul.f32 %v577, %v480
        %v674 = vmul.f32 %v578, %v481
        %v675 = vmul.f32 %v579, %v482
        %v676 = vmul.f32 %v580, %v483
        %v677 = vmul.f32 %v581, %v484
        %v678 = vmul.f32 %v582, %v485
        %v679 = vmul.f32 %v583, %v486
        %v680 = vmul.f32 %v584, %v487
        %v681 = vmul.f32 %v585, %v488
        %v682 = vmul.f32 %v586, %v489
        %v683 = vmul.f32 %v587, %v490
        %v684 = vmul.f32 %v588, %v491
        %v685 = vmul.f32 %v589, %v492
        %v686 = vmul.f32 %v590, %v493
        %v687 = vmul.f32 %v591, %v494
        %v688 = vmul.f32 %v592, %v495
        %v689 = vmul.f32 %v593, %v496
        %v690 = vmul.f32 %v594, %v497
        %v691 = vmul.f32 %v595, %v498
        %v692 = vmul.f32 %v596, %v499
        %v693 = vmul.f32 %v597, 1.442695
        %v694 = vpow.pop %v693
        %v695 = vmul.f32 %v598, 1.442695
        %v696 = vpow.pop %v695
        %v697 = vmul.f32 %v599, 1.442695
        %v698 = vpow.pop %v697
        %v699 = vmul.f32 %v600, 1.442695
        %v700 = vpow.pop %v699
        %v701 = vmul.f32 %v601, 1.442695
        %v702 = vpow.pop %v701
        %v703 = vmul.f32 %v602, 1.442695
        %v704 = vpow.pop %v703
        %v705 = vmul.f32 %v603, 1.442695
        %v706 = vpow.pop %v705
        %v707 = vmul.f32 %v604, 1.442695
        %v708 = vpow.pop %v707
        %v709 = vmul.f32 %v605, 1.442695
        %v710 = vpow.pop %v709
        %v711 = vmul.f32 %v606, 1.442695
        %v712 = vpow.pop %v711
        %v713 = vmul.f32 %v607, 1.442695
        %v714 = vpow.pop %v713
        %v715 = vmul.f32 %v608, 1.442695
        %v716 = vpow.pop %v715
        %v717 = vmul.f32 %v609, 1.442695
        %v718 = vpow.pop %v717
        %v719 = vmul.f32 %v610, 1.442695
        %v720 = vpow.pop %v719
        %v721 = vmul.f32 %v611, 1.442695
        %v722 = vpow.pop %v721
        %v723 = vmul.f32 %v612, 1.442695
        %v724 = vpow.pop %v723
        %v725 = vmul.f32 %v613, 1.442695
        %v726 = vpow.pop %v725
        %v727 = vmul.f32 %v614, 1.442695
        %v728 = vpow.pop %v727
        %v729 = vmul.f32 %v615, 1.442695
        %v730 = vpow.pop %v729
        %v731 = vmul.f32 %v616, 1.442695
        %v732 = vpow.pop %v731
        %v733 = vmul.f32 %v617, 1.442695
        %v734 = vpow.pop %v733
        %v735 = vmul.f32 %v618, 1.442695
        %v736 = vpow.pop %v735
        %v737 = vmul.f32 %v619, 1.442695
        %v738 = vpow.pop %v737
        %v739 = vmul.f32 %v620, 1.442695
        %v740 = vpow.pop %v739
        %v741 = vmul.f32 %v621, 1.442695
        %v742 = vpow.pop %v741
        %v743 = vmul.f32 %v622, 1.442695
        %v744 = vpow.pop %v743
        %v745 = vmul.f32 %v623, 1.442695
        %v746 = vpow.pop %v745
        %v747 = vmul.f32 %v624, 1.442695
        %v748 = vpow.pop %v747
        %v749 = vmul.f32 %v625, 1.442695
        %v750 = vpow.pop %v749
        %v751 = vmul.f32 %v626, 1.442695
        %v752 = vpow.pop %v751
        %v753 = vmul.f32 %v627, 1.442695
        %v754 = vpow.pop %v753
        %v755 = vmul.f32 %v628, 1.442695
        %v756 = vpow.pop %v755
        %v757 = vmul.f32 %v629, 1.442695
        %v758 = vpow.pop %v757
        %v759 = vmul.f32 %v630, 1.442695
        %v760 = vpow.pop %v759
        %v761 = vmul.f32 %v631, 1.442695
        %v762 = vpow.pop %v761
        %v763 = vmul.f32 %v632, 1.442695
        %v764 = vpow.pop %v763
        %v765 = vmul.f32 %v633, 1.442695
        %v766 = vpow.pop %v765
        %v767 = vmul.f32 %v634, 1.442695
        %v768 = vpow.pop %v767
        %v769 = vmul.f32 %v635, 1.442695
        %v770 = vpow.pop %v769
        %v771 = vmul.f32 %v636, 1.442695
        %v772 = vpow.pop %v771
        %v773 = vmul.f32 %v637, 1.442695
        %v774 = vpow.pop %v773
        %v775 = vmul.f32 %v638, 1.442695
        %v776 = vpow.pop %v775
        %v777 = vmul.f32 %v639, 1.442695
        %v778 = vpow.pop %v777
        %v779 = vmul.f32 %v640, 1.442695
        %v780 = vpow.pop %v779
        %v781 = vmul.f32 %v641, 1.442695
        %v782 = vpow.pop %v781
        %v783 = vmul.f32 %v642, 1.442695
        %v784 = vpow.pop %v783
        %v785 = vmul.f32 %v643, 1.442695
        %v786 = vpow.pop %v785
        %v787 = vmul.f32 %v644, 1.442695
        %v788 = vpow.pop %v787
        %v789 = vmul.f32 %v645, 1.442695
        %v790 = vpow.pop %v789
        %v791 = vmul.f32 %v646, 1.442695
        %v792 = vpow.pop %v791
        %v793 = vmul.f32 %v647, 1.442695
        %v794 = vpow.pop %v793
        %v795 = vmul.f32 %v648, 1.442695
        %v796 = vpow.pop %v795
        %v797 = vmul.f32 %v649, 1.442695
        %v798 = vpow.pop %v797
        %v799 = vmul.f32 %v650, 1.442695
        %v800 = vpow.pop %v799
        %v801 = vmul.f32 %v651, 1.442695
        %v802 = vpow.pop %v801
        %v803 = vmul.f32 %v652, 1.442695
        %v804 = vpow.pop %v803
        %v805 = vmul.f32 %v653, 1.442695
        %v806 = vpow.pop %v805
        %v807 = vmul.f32 %v654, 1.442695
        %v808 = vpow.pop %v807
        %v809 = vmul.f32 %v655, 1.442695
        %v810 = vpow.pop %v809
        %v811 = vmul.f32 %v656, 1.442695
        %v812 = vpow.pop %v811
        %v813 = vmul.f32 %v657, 1.442695
        %v814 = vpow.pop %v813
        %v815 = vmul.f32 %v658, 1.442695
        %v816 = vpow.pop %v815
        %v817 = vmul.f32 %v659, 1.442695
        %v818 = vpow.pop %v817
        %v819 = vmul.f32 %v660, 1.442695
        %v820 = vpow.pop %v819
        %v821 = vmul.f32 %v661, 1.442695
        %v822 = vpow.pop %v821
        %v823 = vmul.f32 %v662, 1.442695
        %v824 = vpow.pop %v823
        %v825 = vmul.f32 %v663, 1.442695
        %v826 = vpow.pop %v825
        %v827 = vmul.f32 %v664, 1.442695
        %v828 = vpow.pop %v827
        %v829 = vmul.f32 %v665, 1.442695
        %v830 = vpow.pop %v829
        %v831 = vmul.f32 %v666, 1.442695
        %v832 = vpow.pop %v831
        %v833 = vmul.f32 %v667, 1.442695
        %v834 = vpow.pop %v833
        %v835 = vmul.f32 %v668, 1.442695
        %v836 = vpow.pop %v835
        %v837 = vmul.f32 %v669, 1.442695
        %v838 = vpow.pop %v837
        %v839 = vmul.f32 %v670, 1.442695
        %v840 = vpow.pop %v839
        %v841 = vmul.f32 %v671, 1.442695
        %v842 = vpow.pop %v841
        %v843 = vmul.f32 %v672, 1.442695
        %v844 = vpow.pop %v843
        %v845 = vmul.f32 %v673, 1.442695
        %v846 = vpow.pop %v845
        %v847 = vmul.f32 %v674, 1.442695
        %v848 = vpow.pop %v847
        %v849 = vmul.f32 %v675, 1.442695
        %v850 = vpow.pop %v849
        %v851 = vmul.f32 %v676, 1.442695
        %v852 = vpow.pop %v851
        %v853 = vmul.f32 %v677, 1.442695
        %v854 = vpow.pop %v853
        %v855 = vmul.f32 %v678, 1.442695
        %v856 = vpow.pop %v855
        %v857 = vmul.f32 %v679, 1.442695
        %v858 = vpow.pop %v857
        %v859 = vmul.f32 %v680, 1.442695
        %v860 = vpow.pop %v859
        %v861 = vmul.f32 %v681, 1.442695
        %v862 = vpow.pop %v861
        %v863 = vmul.f32 %v682, 1.442695
        %v864 = vpow.pop %v863
        %v865 = vmul.f32 %v683, 1.442695
        %v866 = vpow.pop %v865
        %v867 = vmul.f32 %v684, 1.442695
        %v868 = vpow.pop %v867
        %v869 = vmul.f32 %v685, 1.442695
        %v870 = vpow.pop %v869
        %v871 = vmul.f32 %v686, 1.442695
        %v872 = vpow.pop %v871
        %v873 = vmul.f32 %v687, 1.442695
        %v874 = vpow.pop %v873
        %v875 = vmul.f32 %v688, 1.442695
        %v876 = vpow.pop %v875
        %v877 = vmul.f32 %v689, 1.442695
        %v878 = vpow.pop %v877
        %v879 = vmul.f32 %v690, 1.442695
        %v880 = vpow.pop %v879
        %v881 = vmul.f32 %v691, 1.442695
        %v882 = vpow.pop %v881
        %v883 = vmul.f32 %v692, 1.442695
        %v884 = vpow.pop %v883
        %885 = vst [vmem:[%s173] sm:$0xff] %v694
        %886 = vst [vmem:[%s173 + $0x8] sm:$0xff] %v696
        %vm887 = vcmask 359424
        %888 = vst.msk [vmem:[%s173 + $0x10] sm:$0xff] %vm887, %v698
        %889 = vst [vmem:[%s173 + $0x18] sm:$0xff] %v700
        %890 = vst [vmem:[%s173 + $0x20] sm:$0xff] %v702
        %891 = vst.msk [vmem:[%s173 + $0x28] sm:$0xff] %vm887, %v704
        %892 = vst [vmem:[%s173 + $0x30] sm:$0xff] %v706
        %893 = vst [vmem:[%s173 + $0x38] sm:$0xff] %v708
        %894 = vst.msk [vmem:[%s173 + $0x40] sm:$0xff] %vm887, %v710
        %895 = vst [vmem:[%s173 + $0x48] sm:$0xff] %v712
        %896 = vst [vmem:[%s173 + $0x50] sm:$0xff] %v714
        %897 = vst.msk [vmem:[%s173 + $0x58] sm:$0xff] %vm887, %v716
        %898 = vst [vmem:[%s173 + $0x60] sm:$0xff] %v718
        %899 = vst [vmem:[%s173 + $0x68] sm:$0xff] %v720
        %900 = vst.msk [vmem:[%s173 + $0x70] sm:$0xff] %vm887, %v722
        %901 = vst [vmem:[%s173 + $0x78] sm:$0xff] %v724
        %902 = vst [vmem:[%s173 + $0x80] sm:$0xff] %v726
        %903 = vst.msk [vmem:[%s173 + $0x88] sm:$0xff] %vm887, %v728
        %904 = vst [vmem:[%s173 + $0x90] sm:$0xff] %v730
        %905 = vst [vmem:[%s173 + $0x98] sm:$0xff] %v732
        %906 = vst.msk [vmem:[%s173 + $0xa0] sm:$0xff] %vm887, %v734
        %907 = vst [vmem:[%s173 + $0xa8] sm:$0xff] %v736
        %908 = vst [vmem:[%s173 + $0xb0] sm:$0xff] %v738
        %909 = vst.msk [vmem:[%s173 + $0xb8] sm:$0xff] %vm887, %v740
        %910 = vst [vmem:[%s173 + $0xc0] sm:$0xff] %v742
        %911 = vst [vmem:[%s173 + $0xc8] sm:$0xff] %v744
        %912 = vst.msk [vmem:[%s173 + $0xd0] sm:$0xff] %vm887, %v746
        %913 = vst [vmem:[%s173 + $0xd8] sm:$0xff] %v748
        %914 = vst [vmem:[%s173 + $0xe0] sm:$0xff] %v750
        %915 = vst.msk [vmem:[%s173 + $0xe8] sm:$0xff] %vm887, %v752
        %916 = vst [vmem:[%s173 + $0xf0] sm:$0xff] %v754
        %917 = vst [vmem:[%s173 + $0xf8] sm:$0xff] %v756
        %918 = vst.msk [vmem:[%s173 + $0x100] sm:$0xff] %vm887, %v758
        %919 = vst [vmem:[%s173 + $0x108] sm:$0xff] %v760
        %920 = vst [vmem:[%s173 + $0x110] sm:$0xff] %v762
        %921 = vst.msk [vmem:[%s173 + $0x118] sm:$0xff] %vm887, %v764
        %922 = vst [vmem:[%s173 + $0x120] sm:$0xff] %v766
        %923 = vst [vmem:[%s173 + $0x128] sm:$0xff] %v768
        %924 = vst.msk [vmem:[%s173 + $0x130] sm:$0xff] %vm887, %v770
        %925 = vst [vmem:[%s173 + $0x138] sm:$0xff] %v772
        %926 = vst [vmem:[%s173 + $0x140] sm:$0xff] %v774
        %927 = vst.msk [vmem:[%s173 + $0x148] sm:$0xff] %vm887, %v776
        %928 = vst [vmem:[%s173 + $0x150] sm:$0xff] %v778
        %929 = vst [vmem:[%s173 + $0x158] sm:$0xff] %v780
        %930 = vst.msk [vmem:[%s173 + $0x160] sm:$0xff] %vm887, %v782
        %931 = vst [vmem:[%s173 + $0x168] sm:$0xff] %v784
        %932 = vst [vmem:[%s173 + $0x170] sm:$0xff] %v786
        %933 = vst.msk [vmem:[%s173 + $0x178] sm:$0xff] %vm887, %v788
        %934 = vst [vmem:[%s173 + $0x180] sm:$0xff] %v790
        %935 = vst [vmem:[%s173 + $0x188] sm:$0xff] %v792
        %936 = vst.msk [vmem:[%s173 + $0x190] sm:$0xff] %vm887, %v794
        %937 = vst [vmem:[%s173 + $0x198] sm:$0xff] %v796
        %938 = vst [vmem:[%s173 + $0x1a0] sm:$0xff] %v798
        %939 = vst.msk [vmem:[%s173 + $0x1a8] sm:$0xff] %vm887, %v800
        %940 = vst [vmem:[%s173 + $0x1b0] sm:$0xff] %v802
        %941 = vst [vmem:[%s173 + $0x1b8] sm:$0xff] %v804
        %942 = vst.msk [vmem:[%s173 + $0x1c0] sm:$0xff] %vm887, %v806
        %943 = vst [vmem:[%s173 + $0x1c8] sm:$0xff] %v808
        %944 = vst [vmem:[%s173 + $0x1d0] sm:$0xff] %v810
        %945 = vst.msk [vmem:[%s173 + $0x1d8] sm:$0xff] %vm887, %v812
        %946 = vst [vmem:[%s173 + $0x1e0] sm:$0xff] %v814
        %947 = vst [vmem:[%s173 + $0x1e8] sm:$0xff] %v816
        %948 = vst.msk [vmem:[%s173 + $0x1f0] sm:$0xff] %vm887, %v818
        %949 = vst [vmem:[%s173 + $0x1f8] sm:$0xff] %v820
        %950 = vst [vmem:[%s173 + $0x200] sm:$0xff] %v822
        %951 = vst.msk [vmem:[%s173 + $0x208] sm:$0xff] %vm887, %v824
        %952 = vst [vmem:[%s173 + $0x210] sm:$0xff] %v826
        %953 = vst [vmem:[%s173 + $0x218] sm:$0xff] %v828
        %954 = vst.msk [vmem:[%s173 + $0x220] sm:$0xff] %vm887, %v830
        %955 = vst [vmem:[%s173 + $0x228] sm:$0xff] %v832
        %956 = vst [vmem:[%s173 + $0x230] sm:$0xff] %v834
        %957 = vst.msk [vmem:[%s173 + $0x238] sm:$0xff] %vm887, %v836
        %958 = vst [vmem:[%s173 + $0x240] sm:$0xff] %v838
        %959 = vst [vmem:[%s173 + $0x248] sm:$0xff] %v840
        %960 = vst.msk [vmem:[%s173 + $0x250] sm:$0xff] %vm887, %v842
        %961 = vst [vmem:[%s173 + $0x258] sm:$0xff] %v844
        %962 = vst [vmem:[%s173 + $0x260] sm:$0xff] %v846
        %963 = vst.msk [vmem:[%s173 + $0x268] sm:$0xff] %vm887, %v848
        %964 = vst [vmem:[%s173 + $0x270] sm:$0xff] %v850
        %965 = vst [vmem:[%s173 + $0x278] sm:$0xff] %v852
        %966 = vst.msk [vmem:[%s173 + $0x280] sm:$0xff] %vm887, %v854
        %967 = vst [vmem:[%s173 + $0x288] sm:$0xff] %v856
        %968 = vst [vmem:[%s173 + $0x290] sm:$0xff] %v858
        %969 = vst.msk [vmem:[%s173 + $0x298] sm:$0xff] %vm887, %v860
        %970 = vst [vmem:[%s173 + $0x2a0] sm:$0xff] %v862
        %971 = vst [vmem:[%s173 + $0x2a8] sm:$0xff] %v864
        %972 = vst.msk [vmem:[%s173 + $0x2b0] sm:$0xff] %vm887, %v866
        %973 = vst [vmem:[%s173 + $0x2b8] sm:$0xff] %v868
        %974 = vst [vmem:[%s173 + $0x2c0] sm:$0xff] %v870
        %975 = vst.msk [vmem:[%s173 + $0x2c8] sm:$0xff] %vm887, %v872
        %976 = vst [vmem:[%s173 + $0x2d0] sm:$0xff] %v874
        %977 = vst [vmem:[%s173 + $0x2d8] sm:$0xff] %v876
        %978 = vst.msk [vmem:[%s173 + $0x2e0] sm:$0xff] %vm887, %v878
        %979 = vst [vmem:[%s173 + $0x2e8] sm:$0xff] %v880
        %980 = vst [vmem:[%s173 + $0x2f0] sm:$0xff] %v882
        %981 = vst.msk [vmem:[%s173 + $0x2f8] sm:$0xff] %vm887, %v884
        %s982 = sand.u32 %s91, 1
        %s983 = sand.u32 %s91, 1
        %s984 = smul.addr %s983, 768
        %s985 = scalar_lea.vmem [#allocation3], %s984
        // Predicated region
        $region33: #{rbf_layer.1} parent=31 // pred_check
          %p986 = pneg %p101
        $region34: #{rbf_layer.1} parent=31 // pred_check_branch
          %988 = sbr.rel (%p986) target = $region36
        $region35: #{rbf_layer.1} parent=31 // pred_region
          %s989 = smul.u32 32, %s15
          %s990 = ssub.s32 125, %s989
          %p991 = scmp.lt.s32.totalorder %s990, 32
          %s992 = scalar_select %p991, %s990, 32
          %s993 = smul.u32 128, %s992
          %s994 = smul.u32 %s993, 3
          %p995 = scmp.ne.s32.totalorder 0, %s994
          %s996 = smul.addr %s989, 3
          %s997 = smul.addr %s996, 8
          %s998 = scalar_lea.vmem %s3, %s997
          // Predicated region
          $region37: #{rbf_layer.1} parent=35 // pred_check
            %p999 = pneg %p995
          $region38: #{rbf_layer.1} parent=35 // pred_check_branch
            %1001 = sbr.rel (%p999) target = $region40
          $region39: #{rbf_layer.1} parent=35 // pred_region
            // Predicated region
            $region41: #{rbf_layer.1} parent=39 // pred_check
              _
            $region42: #{rbf_layer.1} parent=39 // pred_check_branch
              %1003 = sbr.rel (0) target = $region44
            $region43: #{rbf_layer.1} parent=39 // pred_region
              %s1004 = sdiv.u32.pop %s992, 22
              %s1005 = srem.u32.pop %s992, 22
              // While loop
              $region45: #{rbf_layer.1} parent=43 // loop_pre_header
                _
              $region46: #{rbf_layer.1} parent=43 // loop_header
                %s1007 = sphi 0, %s1009
                %p1008 = scmp.ge.s32.totalorder %s1007, %s1004
                %s1012 = sphi 0, %s1149
                %s1013 = sphi %s985, %s1152
                %s1014 = sphi %s998, %s1153
              $region47: #{rbf_layer.1} parent=43 // loop_header_branch
                %1011 = sbr.rel (%p1008) target = $region51
              $region48: #{rbf_layer.1} parent=43 // loop_body
                %v1015 = vld [vmem:[%s1013] sm:$0xff]
                %1016 = vst [vmem:[%s1014] sm:$0xff] %v1015
                %v1017 = vld [vmem:[%s1013 + $0x18] sm:$0xff]
                %1018 = vst [vmem:[%s1014 + $0x18] sm:$0xff] %v1017
                %v1019 = vld [vmem:[%s1013 + $0x30] sm:$0xff]
                %1020 = vst [vmem:[%s1014 + $0x30] sm:$0xff] %v1019
                %v1021 = vld [vmem:[%s1013 + $0x48] sm:$0xff]
                %1022 = vst [vmem:[%s1014 + $0x48] sm:$0xff] %v1021
                %v1023 = vld [vmem:[%s1013 + $0x60] sm:$0xff]
                %1024 = vst [vmem:[%s1014 + $0x60] sm:$0xff] %v1023
                %v1025 = vld [vmem:[%s1013 + $0x78] sm:$0xff]
                %1026 = vst [vmem:[%s1014 + $0x78] sm:$0xff] %v1025
                %v1027 = vld [vmem:[%s1013 + $0x90] sm:$0xff]
                %1028 = vst [vmem:[%s1014 + $0x90] sm:$0xff] %v1027
                %v1029 = vld [vmem:[%s1013 + $0xa8] sm:$0xff]
                %1030 = vst [vmem:[%s1014 + $0xa8] sm:$0xff] %v1029
                %v1031 = vld [vmem:[%s1013 + $0xc0] sm:$0xff]
                %1032 = vst [vmem:[%s1014 + $0xc0] sm:$0xff] %v1031
                %v1033 = vld [vmem:[%s1013 + $0xd8] sm:$0xff]
                %1034 = vst [vmem:[%s1014 + $0xd8] sm:$0xff] %v1033
                %v1035 = vld [vmem:[%s1013 + $0xf0] sm:$0xff]
                %1036 = vst [vmem:[%s1014 + $0xf0] sm:$0xff] %v1035
                %v1037 = vld [vmem:[%s1013 + $0x108] sm:$0xff]
                %1038 = vst [vmem:[%s1014 + $0x108] sm:$0xff] %v1037
                %v1039 = vld [vmem:[%s1013 + $0x120] sm:$0xff]
                %1040 = vst [vmem:[%s1014 + $0x120] sm:$0xff] %v1039
                %v1041 = vld [vmem:[%s1013 + $0x138] sm:$0xff]
                %1042 = vst [vmem:[%s1014 + $0x138] sm:$0xff] %v1041
                %v1043 = vld [vmem:[%s1013 + $0x150] sm:$0xff]
                %1044 = vst [vmem:[%s1014 + $0x150] sm:$0xff] %v1043
                %v1045 = vld [vmem:[%s1013 + $0x168] sm:$0xff]
                %1046 = vst [vmem:[%s1014 + $0x168] sm:$0xff] %v1045
                %v1047 = vld [vmem:[%s1013 + $0x180] sm:$0xff]
                %1048 = vst [vmem:[%s1014 + $0x180] sm:$0xff] %v1047
                %v1049 = vld [vmem:[%s1013 + $0x198] sm:$0xff]
                %1050 = vst [vmem:[%s1014 + $0x198] sm:$0xff] %v1049
                %v1051 = vld [vmem:[%s1013 + $0x1b0] sm:$0xff]
                %1052 = vst [vmem:[%s1014 + $0x1b0] sm:$0xff] %v1051
                %v1053 = vld [vmem:[%s1013 + $0x1c8] sm:$0xff]
                %1054 = vst [vmem:[%s1014 + $0x1c8] sm:$0xff] %v1053
                %v1055 = vld [vmem:[%s1013 + $0x1e0] sm:$0xff]
                %1056 = vst [vmem:[%s1014 + $0x1e0] sm:$0xff] %v1055
                %v1057 = vld [vmem:[%s1013 + $0x1f8] sm:$0xff]
                %1058 = vst [vmem:[%s1014 + $0x1f8] sm:$0xff] %v1057
                %v1059 = vld [vmem:[%s1013 + $0x8] sm:$0xff]
                %1060 = vst [vmem:[%s1014 + $0x8] sm:$0xff] %v1059
                %v1061 = vld [vmem:[%s1013 + $0x20] sm:$0xff]
                %1062 = vst [vmem:[%s1014 + $0x20] sm:$0xff] %v1061
                %v1063 = vld [vmem:[%s1013 + $0x38] sm:$0xff]
                %1064 = vst [vmem:[%s1014 + $0x38] sm:$0xff] %v1063
                %v1065 = vld [vmem:[%s1013 + $0x50] sm:$0xff]
                %1066 = vst [vmem:[%s1014 + $0x50] sm:$0xff] %v1065
                %v1067 = vld [vmem:[%s1013 + $0x68] sm:$0xff]
                %1068 = vst [vmem:[%s1014 + $0x68] sm:$0xff] %v1067
                %v1069 = vld [vmem:[%s1013 + $0x80] sm:$0xff]
                %1070 = vst [vmem:[%s1014 + $0x80] sm:$0xff] %v1069
                %v1071 = vld [vmem:[%s1013 + $0x98] sm:$0xff]
                %1072 = vst [vmem:[%s1014 + $0x98] sm:$0xff] %v1071
                %v1073 = vld [vmem:[%s1013 + $0xb0] sm:$0xff]
                %1074 = vst [vmem:[%s1014 + $0xb0] sm:$0xff] %v1073
                %v1075 = vld [vmem:[%s1013 + $0xc8] sm:$0xff]
                %1076 = vst [vmem:[%s1014 + $0xc8] sm:$0xff] %v1075
                %v1077 = vld [vmem:[%s1013 + $0xe0] sm:$0xff]
                %1078 = vst [vmem:[%s1014 + $0xe0] sm:$0xff] %v1077
                %v1079 = vld [vmem:[%s1013 + $0xf8] sm:$0xff]
                %1080 = vst [vmem:[%s1014 + $0xf8] sm:$0xff] %v1079
                %v1081 = vld [vmem:[%s1013 + $0x110] sm:$0xff]
                %1082 = vst [vmem:[%s1014 + $0x110] sm:$0xff] %v1081
                %v1083 = vld [vmem:[%s1013 + $0x128] sm:$0xff]
                %1084 = vst [vmem:[%s1014 + $0x128] sm:$0xff] %v1083
                %v1085 = vld [vmem:[%s1013 + $0x140] sm:$0xff]
                %1086 = vst [vmem:[%s1014 + $0x140] sm:$0xff] %v1085
                %v1087 = vld [vmem:[%s1013 + $0x158] sm:$0xff]
                %1088 = vst [vmem:[%s1014 + $0x158] sm:$0xff] %v1087
                %v1089 = vld [vmem:[%s1013 + $0x170] sm:$0xff]
                %1090 = vst [vmem:[%s1014 + $0x170] sm:$0xff] %v1089
                %v1091 = vld [vmem:[%s1013 + $0x188] sm:$0xff]
                %1092 = vst [vmem:[%s1014 + $0x188] sm:$0xff] %v1091
                %v1093 = vld [vmem:[%s1013 + $0x1a0] sm:$0xff]
                %1094 = vst [vmem:[%s1014 + $0x1a0] sm:$0xff] %v1093
                %v1095 = vld [vmem:[%s1013 + $0x1b8] sm:$0xff]
                %1096 = vst [vmem:[%s1014 + $0x1b8] sm:$0xff] %v1095
                %v1097 = vld [vmem:[%s1013 + $0x1d0] sm:$0xff]
                %1098 = vst [vmem:[%s1014 + $0x1d0] sm:$0xff] %v1097
                %v1099 = vld [vmem:[%s1013 + $0x1e8] sm:$0xff]
                %1100 = vst [vmem:[%s1014 + $0x1e8] sm:$0xff] %v1099
                %v1101 = vld [vmem:[%s1013 + $0x200] sm:$0xff]
                %1102 = vst [vmem:[%s1014 + $0x200] sm:$0xff] %v1101
                %v1103 = vld [vmem:[%s1013 + $0x10] sm:$0xff]
                %1104 = vst [vmem:[%s1014 + $0x10] sm:$0xff] %v1103
                %v1105 = vld [vmem:[%s1013 + $0x28] sm:$0xff]
                %1106 = vst [vmem:[%s1014 + $0x28] sm:$0xff] %v1105
                %v1107 = vld [vmem:[%s1013 + $0x40] sm:$0xff]
                %1108 = vst [vmem:[%s1014 + $0x40] sm:$0xff] %v1107
                %v1109 = vld [vmem:[%s1013 + $0x58] sm:$0xff]
                %1110 = vst [vmem:[%s1014 + $0x58] sm:$0xff] %v1109
                %v1111 = vld [vmem:[%s1013 + $0x70] sm:$0xff]
                %1112 = vst [vmem:[%s1014 + $0x70] sm:$0xff] %v1111
                %v1113 = vld [vmem:[%s1013 + $0x88] sm:$0xff]
                %1114 = vst [vmem:[%s1014 + $0x88] sm:$0xff] %v1113
                %v1115 = vld [vmem:[%s1013 + $0xa0] sm:$0xff]
                %1116 = vst [vmem:[%s1014 + $0xa0] sm:$0xff] %v1115
                %v1117 = vld [vmem:[%s1013 + $0xb8] sm:$0xff]
                %1118 = vst [vmem:[%s1014 + $0xb8] sm:$0xff] %v1117
                %v1119 = vld [vmem:[%s1013 + $0xd0] sm:$0xff]
                %1120 = vst [vmem:[%s1014 + $0xd0] sm:$0xff] %v1119
                %v1121 = vld [vmem:[%s1013 + $0xe8] sm:$0xff]
                %1122 = vst [vmem:[%s1014 + $0xe8] sm:$0xff] %v1121
                %v1123 = vld [vmem:[%s1013 + $0x100] sm:$0xff]
                %1124 = vst [vmem:[%s1014 + $0x100] sm:$0xff] %v1123
                %v1125 = vld [vmem:[%s1013 + $0x118] sm:$0xff]
                %1126 = vst [vmem:[%s1014 + $0x118] sm:$0xff] %v1125
                %v1127 = vld [vmem:[%s1013 + $0x130] sm:$0xff]
                %1128 = vst [vmem:[%s1014 + $0x130] sm:$0xff] %v1127
                %v1129 = vld [vmem:[%s1013 + $0x148] sm:$0xff]
                %1130 = vst [vmem:[%s1014 + $0x148] sm:$0xff] %v1129
                %v1131 = vld [vmem:[%s1013 + $0x160] sm:$0xff]
                %1132 = vst [vmem:[%s1014 + $0x160] sm:$0xff] %v1131
                %v1133 = vld [vmem:[%s1013 + $0x178] sm:$0xff]
                %1134 = vst [vmem:[%s1014 + $0x178] sm:$0xff] %v1133
                %v1135 = vld [vmem:[%s1013 + $0x190] sm:$0xff]
                %1136 = vst [vmem:[%s1014 + $0x190] sm:$0xff] %v1135
                %v1137 = vld [vmem:[%s1013 + $0x1a8] sm:$0xff]
                %1138 = vst [vmem:[%s1014 + $0x1a8] sm:$0xff] %v1137
                %v1139 = vld [vmem:[%s1013 + $0x1c0] sm:$0xff]
                %1140 = vst [vmem:[%s1014 + $0x1c0] sm:$0xff] %v1139
                %v1141 = vld [vmem:[%s1013 + $0x1d8] sm:$0xff]
                %1142 = vst [vmem:[%s1014 + $0x1d8] sm:$0xff] %v1141
                %v1143 = vld [vmem:[%s1013 + $0x1f0] sm:$0xff]
                %1144 = vst [vmem:[%s1014 + $0x1f0] sm:$0xff] %v1143
                %v1145 = vld [vmem:[%s1013 + $0x208] sm:$0xff]
                %1146 = vst [vmem:[%s1014 + $0x208] sm:$0xff] %v1145
                %s1147 = sadd.s32 1, %s1012
                %p1148 = scmp.ge.s32.totalorder %s1147, %s1004
                %s1149 = scalar_select %p1148, 0, %s1147
                %s1150 = smul.u32 %s1149, 528
                %s1151 = smul.u32 %s1149, 528
                %s1152 = scalar_lea.vmem %s985, %s1150 [#allocation3]
                %s1153 = scalar_lea.vmem %s998, %s1151
              $region49: #{rbf_layer.1} parent=43 // loop_footer
                %s1009 = sadd.s32 %s1007, 1
              $region50: #{rbf_layer.1} parent=43 // loop_footer_branch
                %1006 = sbr.rel target = $region46
              $region51: #{rbf_layer.1} parent=43 // loop_exit
                _
              %s1154 = sdiv.u32.pop %s992, 22
              %s1155 = srem.u32.pop %s992, 22
              %s1156 = smul.u32 %s1154, 22
              %s1157 = smul.u32 24, %s1156
              %s1158 = scalar_lea.vmem %s985, %s1157 [#allocation3]
              %s1159 = smul.u32 24, %s1156
              %s1160 = scalar_lea.vmem %s998, %s1159
              // While loop
              $region52: #{rbf_layer.1} parent=43 // loop_pre_header
                _
              $region53: #{rbf_layer.1} parent=43 // loop_header
                %s1162 = sphi 0, %s1164
                %p1163 = scmp.ge.s32.totalorder %s1162, %s1155
                %s1167 = sphi 0, %s1178
                %s1168 = sphi %s1158, %s1181
                %s1169 = sphi %s1160, %s1182
              $region54: #{rbf_layer.1} parent=43 // loop_header_branch
                %1166 = sbr.rel (%p1163) target = $region58
              $region55: #{rbf_layer.1} parent=43 // loop_body
                %v1170 = vld [vmem:[%s1168] sm:$0xff]
                %1171 = vst [vmem:[%s1169] sm:$0xff] %v1170
                %v1172 = vld [vmem:[%s1168 + $0x8] sm:$0xff]
                %1173 = vst [vmem:[%s1169 + $0x8] sm:$0xff] %v1172
                %v1174 = vld [vmem:[%s1168 + $0x10] sm:$0xff]
                %1175 = vst [vmem:[%s1169 + $0x10] sm:$0xff] %v1174
                %s1176 = sadd.s32 1, %s1167
                %p1177 = scmp.ge.s32.totalorder %s1176, %s1155
                %s1178 = scalar_select %p1177, 0, %s1176
                %s1179 = smul.u32 %s1178, 24
                %s1180 = smul.u32 %s1178, 24
                %s1181 = scalar_lea.vmem %s1158, %s1179 [#allocation3]
                %s1182 = scalar_lea.vmem %s1160, %s1180
              $region56: #{rbf_layer.1} parent=43 // loop_footer
                %s1164 = sadd.s32 %s1162, 1
              $region57: #{rbf_layer.1} parent=43 // loop_footer_branch
                %1161 = sbr.rel target = $region53
              $region58: #{rbf_layer.1} parent=43 // loop_exit
                _
            $region44: #{rbf_layer.1} parent=39 // pred_fallthru
              _
            // Predicated region
            $region59: #{rbf_layer.1} parent=39 // pred_check
              _
            $region60: #{rbf_layer.1} parent=39 // pred_check_branch
              %1184 = sbr.rel target = $region62
            $region61: #{rbf_layer.1} parent=39 // pred_region
              _
            $region62: #{rbf_layer.1} parent=39 // pred_fallthru
              _
          $region40: #{rbf_layer.1} parent=35 // pred_fallthru
            _
          %1185 = vnop
        $region36: #{rbf_layer.1} parent=31 // pred_fallthru
          _
      $region32: #{rbf_layer.1} parent=5 // pred_fallthru
        _
      %p1186 = scmp.le.s32.totalorder 2, %s10
      // Predicated region
      $region63: #{rbf_layer.1} parent=5 // pred_check
        %p1187 = pneg %p1186
      $region64: #{rbf_layer.1} parent=5 // pred_check_branch
        %1189 = sbr.rel (%p1187) target = $region66
      $region65: #{rbf_layer.1} parent=5 // pred_region
        %s1190 = ssub.s32 %s10, 2
        // Predicated region
        $region67: #{rbf_layer.1} parent=65 // pred_check
          %p1191 = pneg %p107
        $region68: #{rbf_layer.1} parent=65 // pred_check_branch
          %1193 = sbr.rel (%p1191) target = $region70
        $region69: #{rbf_layer.1} parent=65 // pred_region
          %s1194 = sand.u32 %s92, 1
          %s1195 = sand.u32 %s92, 1
          %s1196 = smul.addr %s1195, 768
          %s1197 = scalar_lea.vmem [#allocation3], %s1196
        $region70: #{rbf_layer.1} parent=65 // pred_fallthru
          _
      $region66: #{rbf_layer.1} parent=5 // pred_fallthru
        _
    $region6: #{rbf_layer.1} parent=1 // loop_footer
      %s14 = sadd.s32 1, %s10
    $region7: #{rbf_layer.1} parent=1 // loop_footer_branch
      %9 = sbr.rel target = $region3
    $region8: #{rbf_layer.1} parent=1 // loop_exit
      _

</llo_original>
